<compile_context>
chip_gen: v7x
topology: tpu7x:2x2x1
jax: 0.10.0
libtpu: 0.0.40
codegen_flags: <defaults>
</compile_context>

<pallas_src>
import jax
import jax.numpy as jnp
from jax.experimental import pallas as pl
from jax.experimental.pallas import tpu as pltpu


def _round_up(v, m):
    return ((v + m - 1) // m) * m


def and_layer_kernel(x_ref, w_ref, o_ref, csum_ref):
    """Grid = (M_tiles, N_tiles, K_tiles); K (reduction) is the innermost axis."""
    k = pl.program_id(2)

    @pl.when(k == 0)
    def _():
        o_ref[...] = jnp.zeros_like(o_ref)
        csum_ref[...] = jnp.zeros_like(csum_ref)

    w = w_ref[...].astype(jnp.float32)  # exact: W is {0,1}, stored bf16
    # MXU matmul, f32 accumulation straight into the resident output block.
    o_ref[...] += jnp.dot(x_ref[...], w, preferred_element_type=jnp.float32)
    # Column sums of W from the tiles already in VMEM (XLU sublane reduce,
    # effectively free next to the MXU/DMA bottleneck).
    csum_ref[...] += jnp.sum(w, axis=0, keepdims=True)

    @pl.when(k == pl.num_programs(2) - 1)
    def _():
        # out = 1 - min(colsum - acc, 1) == max(acc + (1 - colsum), 0)
        o_ref[...] = jnp.maximum(o_ref[...] + (1.0 - csum_ref[...]), 0.0)


def make_and_layer(weight, *, w_dtype=jnp.bfloat16,
                   tm_max=512, tn_max=512, tk_max=512):
    """Build an ANDLayer forward for a fixed weight.

    Pads + casts the weight ONCE (per weight update), not per forward call.
    """
    K, N = weight.shape
    tk = min(_round_up(K, 128), tk_max)
    tn = min(_round_up(N, 128), tn_max)
    Kp = _round_up(K, tk)
    Np = _round_up(N, tn)
    # Zero padding is semantics-preserving: padded K rows contribute nothing
    # to x@W or colsum; padded N columns are sliced off after the kernel.
    w_p = jnp.pad(weight, ((0, Kp - K), (0, Np - N))).astype(w_dtype)

    @jax.jit
    def apply(x):
        B, Kx = x.shape
        assert Kx == K
        out_dtype = x.dtype
        # Don't inflate small batches to a full 128/512 tile; sublane
        # alignment (8) is enough for f32 x / f32 out blocks.
        tm = min(_round_up(B, 8), tm_max)
        Bp = _round_up(B, tm)
        x_p = jnp.pad(x.astype(jnp.float32), ((0, Bp - B), (0, Kp - K)))

        grid = (Bp // tm, Np // tn, Kp // tk)

        cost = pl.CostEstimate(
            flops=2 * Bp * Kp * Np,
            transcendentals=0,
            bytes_accessed=(Bp * Kp * 4) * grid[1]                 # x per N tile
                          + (Kp * Np * w_p.dtype.itemsize) * grid[0]  # W per M tile
                          + Bp * Np * 4,                           # output
        )

        out_p = pl.pallas_call(
            and_layer_kernel,
            out_shape=jax.ShapeDtypeStruct((Bp, Np), jnp.float32),
            grid_spec=pltpu.PrefetchScalarGridSpec(
                num_scalar_prefetch=0,
                grid=grid,
                in_specs=[
                    pl.BlockSpec((tm, tk), lambda i, j, k: (i, k)),  # x tile
                    pl.BlockSpec((tk, tn), lambda i, j, k: (k, j)),  # W tile
                ],
                out_specs=pl.BlockSpec((tm, tn), lambda i, j, k: (i, j)),
                scratch_shapes=[pltpu.VMEM((1, tn), jnp.float32)],   # colsum(W)
            ),
            compiler_params=pltpu.CompilerParams(
                # M/N independent -> parallel (megacore shard on v7x);
                # K carries the resident output accumulator -> arbitrary.
                dimension_semantics=("parallel", "parallel", "arbitrary"),
            ),
            cost_estimate=cost,
        )(x_p, w_p)

        return out_p[:B, :N].astype(out_dtype)

    return apply


def and_layer(x, weight, **kwargs):
    """One-shot convenience wrapper (re-preps the weight every call)."""
    return make_and_layer(weight, **kwargs)(x)


if __name__ == "__main__":
    key = jax.random.PRNGKey(0)

    # Case 0: module-scale small shapes (single-tile grid, tm = 8).
    # Case 1: tiles capped at 128 so the padded problem runs a real
    #         (2, 2, 3) grid and exercises the K-reduction + finalize path.
    cases = [
        (8, 32, 16, {}),
        (192, 320, 200, dict(tm_max=128, tn_max=128, tk_max=128)),
    ]

    for idx, (batch, input_size, output_size, caps) in enumerate(cases):
        k_x, k_w = jax.random.split(jax.random.fold_in(key, idx))

        # Inputs in [0, 1] (fuzzy-logic style activations).
        x = jax.random.uniform(k_x, (batch, input_size), dtype=jnp.float32)

        # TODO(synk): BinaryWeight's parameterization (e.g. straight-through
        # sigmoid) is not defined in the provided source; use a fixed
        # Bernoulli(0.1) binary matrix as the realized {0,1} weight.
        weight = jax.random.bernoulli(
            k_w, 0.1, (input_size, output_size)
        ).astype(jnp.float32)

        forward = make_and_layer(weight, **caps)
        out = forward(x)
        jax.block_until_ready(out)

        # Reference in plain JAX; force full-precision matmul so the reference
        # itself doesn't drop to bf16 passes on TPU.
        prod = jnp.dot(1.0 - x, weight, precision=jax.lax.Precision.HIGHEST)
        ref = 1.0 - jnp.minimum(prod, 1.0)

        assert out.shape == (batch, output_size)
        max_err = float(jnp.max(jnp.abs(out - ref)))
        assert jnp.allclose(out, ref, atol=1e-3, rtol=1e-3), (
            f"mismatch at shapes {(batch, input_size, output_size)}: "
            f"max err {max_err}"
        )

    print("KERNEL_OK")
</pallas_src>

<mosaic_0001>
module attributes {stable_mosaic.version = 11 : i64} {
  func.func @and_layer_kernel(%arg0: i32, %arg1: i32, %arg2: i32, %arg3: memref<8x128xf32, #tpu.memory_space<vmem>>, %arg4: memref<128x128xbf16, #tpu.memory_space<vmem>>, %arg5: memref<8x128xf32, #tpu.memory_space<vmem>>, %arg6: memref<1x128xf32, #tpu.memory_space<vmem>>) attributes {dimension_semantics = [#tpu.dimension_semantics<parallel>, #tpu.dimension_semantics<parallel>, #tpu.dimension_semantics<arbitrary>], iteration_bounds = array<i64: 1, 1, 1>, scalar_prefetch = 0 : i64, scratch_operands = 1 : i64, tpu.core_type = #tpu.core_type<tc>, window_params = [{transform_indices = @transform_0, window_bounds = array<i64: 8, 128>}, {transform_indices = @transform_1, window_bounds = array<i64: 128, 128>}, {transform_indices = @transform_2, window_bounds = array<i64: 8, 128>}]} {
    %c0_i32 = arith.constant 0 : i32
    %0 = arith.cmpi eq, %arg2, %c0_i32 : i32
    %1 = arith.extui %0 : i1 to i32
    %c0_i32_0 = arith.constant 0 : i32
    %2 = arith.cmpi ne, %1, %c0_i32_0 : i32
    scf.if %2 {
      %cst_15 = arith.constant 0.000000e+00 : f32
      %18 = vector.broadcast %cst_15 : f32 to vector<8x128xf32>
      %c0_16 = arith.constant 0 : index
      %c0_17 = arith.constant 0 : index
      %19 = vector.load %arg5[%c0_16, %c0_17] : memref<8x128xf32, #tpu.memory_space<vmem>>, vector<8x128xf32>
      tpu.vector_store %arg5[%c0_16, %c0_17], %18 {strides = array<i32>} : memref<8x128xf32, #tpu.memory_space<vmem>>, vector<8x128xf32>,
      %cst_18 = arith.constant 0.000000e+00 : f32
      %20 = vector.broadcast %cst_18 : f32 to vector<1x128xf32>
      %c0_19 = arith.constant 0 : index
      %c0_20 = arith.constant 0 : index
      %21 = vector.load %arg6[%c0_19, %c0_20] : memref<1x128xf32, #tpu.memory_space<vmem>>, vector<1x128xf32>
      tpu.vector_store %arg6[%c0_19, %c0_20], %20 {strides = array<i32>} : memref<1x128xf32, #tpu.memory_space<vmem>>, vector<1x128xf32>,
    } else {
    }
    %c0 = arith.constant 0 : index
    %c0_1 = arith.constant 0 : index
    %3 = vector.load %arg4[%c0, %c0_1] : memref<128x128xbf16, #tpu.memory_space<vmem>>, vector<128x128xbf16>
    %4 = arith.extf %3 : vector<128x128xbf16> to vector<128x128xf32>
    %c0_2 = arith.constant 0 : index
    %c0_3 = arith.constant 0 : index
    %5 = vector.load %arg5[%c0_2, %c0_3] : memref<8x128xf32, #tpu.memory_space<vmem>>, vector<8x128xf32>
    %c0_4 = arith.constant 0 : index
    %c0_5 = arith.constant 0 : index
    %6 = vector.load %arg3[%c0_4, %c0_5] : memref<8x128xf32, #tpu.memory_space<vmem>>, vector<8x128xf32>
    %cst = arith.constant dense<0.000000e+00> : vector<8x128xf32>
    %7 = tpu.matmul %6, %4, %cst {dimension_numbers = #tpu.dot_dimension_numbers<[1], [0], [0], [1], [0, 0, 1, 1], [], []>} : vector<8x128xf32>, vector<128x128xf32>, vector<8x128xf32> -> vector<8x128xf32>
    %8 = arith.addf %5, %7 : vector<8x128xf32>
    %c0_6 = arith.constant 0 : index
    %c0_7 = arith.constant 0 : index
    %9 = vector.load %arg5[%c0_6, %c0_7] : memref<8x128xf32, #tpu.memory_space<vmem>>, vector<8x128xf32>
    tpu.vector_store %arg5[%c0_6, %c0_7], %8 {strides = array<i32>} : memref<8x128xf32, #tpu.memory_space<vmem>>, vector<8x128xf32>,
    %c0_8 = arith.constant 0 : index
    %c0_9 = arith.constant 0 : index
    %10 = vector.load %arg6[%c0_8, %c0_9] : memref<1x128xf32, #tpu.memory_space<vmem>>, vector<1x128xf32>
    %cst_10 = arith.constant dense<0.000000e+00> : vector<128xf32>
    %11 = vector.multi_reduction <add>, %4, %cst_10 [0] : vector<128x128xf32> to vector<128xf32>
    %12 = vector.shape_cast %11 : vector<128xf32> to vector<1x128xf32>
    %13 = arith.addf %10, %12 : vector<1x128xf32>
    %c0_11 = arith.constant 0 : index
    %c0_12 = arith.constant 0 : index
    %14 = vector.load %arg6[%c0_11, %c0_12] : memref<1x128xf32, #tpu.memory_space<vmem>>, vector<1x128xf32>
    tpu.vector_store %arg6[%c0_11, %c0_12], %13 {strides = array<i32>} : memref<1x128xf32, #tpu.memory_space<vmem>>, vector<1x128xf32>,
    %c0_i32_13 = arith.constant 0 : i32
    %15 = arith.cmpi eq, %arg2, %c0_i32_13 : i32
    %16 = arith.extui %15 : i1 to i32
    %c0_i32_14 = arith.constant 0 : i32
    %17 = arith.cmpi ne, %16, %c0_i32_14 : i32
    scf.if %17 {
      %c0_15 = arith.constant 0 : index
      %c0_16 = arith.constant 0 : index
      %18 = vector.load %arg5[%c0_15, %c0_16] : memref<8x128xf32, #tpu.memory_space<vmem>>, vector<8x128xf32>
      %c0_17 = arith.constant 0 : index
      %c0_18 = arith.constant 0 : index
      %19 = vector.load %arg6[%c0_17, %c0_18] : memref<1x128xf32, #tpu.memory_space<vmem>>, vector<1x128xf32>
      %cst_19 = arith.constant 1.000000e+00 : f32
      %20 = vector.broadcast %cst_19 : f32 to vector<1x128xf32>
      %21 = arith.subf %20, %19 : vector<1x128xf32>
      %22 = vector.broadcast %21 : vector<1x128xf32> to vector<8x128xf32>
      %23 = arith.addf %18, %22 : vector<8x128xf32>
      %cst_20 = arith.constant 0.000000e+00 : f32
      %24 = vector.broadcast %cst_20 : f32 to vector<8x128xf32>
      %25 = arith.maximumf %23, %24 : vector<8x128xf32>
      %c0_21 = arith.constant 0 : index
      %c0_22 = arith.constant 0 : index
      %26 = vector.load %arg5[%c0_21, %c0_22] : memref<8x128xf32, #tpu.memory_space<vmem>>, vector<8x128xf32>
      tpu.vector_store %arg5[%c0_21, %c0_22], %25 {strides = array<i32>} : memref<8x128xf32, #tpu.memory_space<vmem>>, vector<8x128xf32>,
    } else {
    }
    return
  }
  func.func @transform_0(%arg0: i32, %arg1: i32, %arg2: i32) -> (i32, i32) {
    %c0_i32 = arith.constant 0 : i32
    return %arg0, %arg2 : i32, i32
  }
  func.func @transform_1(%arg0: i32, %arg1: i32, %arg2: i32) -> (i32, i32) {
    %c0_i32 = arith.constant 0 : i32
    return %arg2, %arg1 : i32, i32
  }
  func.func @transform_2(%arg0: i32, %arg1: i32, %arg2: i32) -> (i32, i32) {
    %c0_i32 = arith.constant 0 : i32
    return %arg0, %arg1 : i32, i32
  }
}

</mosaic_0001>

<llo_original>
// kernel: apply.1
$region0: #{apply.1}
  #allocation0 [shape = 'u32[]', space=smem, size = 0x4, offset = 0x4, fixed_abs, tag = 'smem constant byte address 0x4 - core index']
  #allocation1 [shape = 'u32[144,128]{1,0:T(1,128)}', space=vmem, size = 0x12000, scoped, tag = 'internal scratch']
  #allocation2 [shape = 'f32[1,128]{1,0:T(1,128)}', space=vmem, size = 0x200, scoped, tag = 'scratch operand']
  %s0 = inlined_call_operand.vmem [shape: f32[8,128], index: 0, kind: input, shape index: {}]
  %s1 = inlined_call_operand.hbm [shape: bf16[128,128], index: 1, kind: input, shape index: {}]
  %s2 = inlined_call_operand.hbm [shape: f32[8,128], index: 2, kind: output, shape index: {}]
  %s3 = sld [smem:[#allocation0]]
  $region30: #{apply.1} parent=0
    _
  %s5 = ssub.s32 1, %s3
  %s6 = scalar_select 0, %s5, %s3
  $region1: #{apply.1} parent=0
    #allocation3 [shape = 'u8[32768]{0}', space=vmem, size = 0x8000, scoped, tag = 'input window, operand 1, single buffered']
    #allocation4 [shape = 's32[1]{0}', space=sflag, size = 0x4, scoped, tag = 'scoped memory for apply.1']
    #allocation5 [shape = 's32[1]{0}', space=sflag, size = 0x4, scoped, tag = 'scoped memory for apply.1']
    #allocation6 [shape = 'u8[4096]{0}', space=vmem, size = 0x1000, scoped, tag = 'output window, operand 0, single buffered']
    %7 = vsyncpa [#allocation4], 0
    %8 = vsyncpa [#allocation5], 0
    // Predicated region
    $region2: #{apply.1} parent=1 // pred_check
      _
    $region3: #{apply.1} parent=1 // pred_check_branch
      %10 = sbr.rel (0) target = $region5
    $region4: #{apply.1} parent=1 // pred_region
      _
    $region5: #{apply.1} parent=1 // pred_fallthru
      _
    // Predicated region
    $region6: #{apply.1} parent=1 // pred_check
      _
    $region7: #{apply.1} parent=1 // pred_check_branch
      %12 = sbr.rel (0) target = $region9
    $region8: #{apply.1} parent=1 // pred_region
      %s14 = ssub.s32 1024, 1024
      %15 = vsyncadd [#allocation4], %s14
      %s16 = sshll.u32 [#allocation3], 4
      %s17 = int_to_ptr.vmem [resolvable:$true] %s16
      %22 = dma.hbm_to_vmem [thread:$0]  %s1, 1024, %s17, [#allocation4], 64, 64, 4
    $region9: #{apply.1} parent=1 // pred_fallthru
      _
    // Predicated region
    $region10: #{apply.1} parent=1 // pred_check
      _
    $region11: #{apply.1} parent=1 // pred_check_branch
      %24 = sbr.rel (0) target = $region13
    $region12: #{apply.1} parent=1 // pred_region
      %25 = dma.done [#allocation4], 1024
    $region13: #{apply.1} parent=1 // pred_fallthru
      _
    %p26 = scmp.eq.s32.totalorder 0, 0
    // Predicated region
    $region14: #{apply.1} parent=1 // pred_check
      %p27 = pneg %p26
    $region15: #{apply.1} parent=1 // pred_check_branch
      %29 = sbr.rel (%p27) target = $region17
    $region16: #{apply.1} parent=1 // pred_region
      %30 = vst [vmem:[#allocation6] sm:$0xff] 0.0
      %31 = vst [vmem:[#allocation2] sm:$0x1] 0.0
    $region17: #{apply.1} parent=1 // pred_fallthru
      _
    %v32 = vld [vmem:[#allocation3] sm:$0xf]
    %v33 = vld [vmem:[#allocation3 + $0x4] sm:$0xf]
    %v34 = vld [vmem:[#allocation3 + $0x8] sm:$0xf]
    %v35 = vld [vmem:[#allocation3 + $0xc] sm:$0xf]
    %v36 = vld [vmem:[#allocation3 + $0x10] sm:$0xf]
    %v37 = vld [vmem:[#allocation3 + $0x14] sm:$0xf]
    %v38 = vld [vmem:[#allocation3 + $0x18] sm:$0xf]
    %v39 = vld [vmem:[#allocation3 + $0x1c] sm:$0xf]
    %v40 = vld [vmem:[#allocation3 + $0x20] sm:$0xf]
    %v41 = vld [vmem:[#allocation3 + $0x24] sm:$0xf]
    %v42 = vld [vmem:[#allocation3 + $0x28] sm:$0xf]
    %v43 = vld [vmem:[#allocation3 + $0x2c] sm:$0xf]
    %v44 = vld [vmem:[#allocation3 + $0x30] sm:$0xf]
    %v45 = vld [vmem:[#allocation3 + $0x34] sm:$0xf]
    %v46 = vld [vmem:[#allocation3 + $0x38] sm:$0xf]
    %v47 = vld [vmem:[#allocation3 + $0x3c] sm:$0xf]
    %v48 = vunpack.c.l.bf16 %v32
    %v49 = vunpack.c.l.bf16 %v33
    %v50 = vunpack.c.l.bf16 %v34
    %v51 = vunpack.c.l.bf16 %v35
    %v52 = vunpack.c.l.bf16 %v36
    %v53 = vunpack.c.l.bf16 %v37
    %v54 = vunpack.c.l.bf16 %v38
    %v55 = vunpack.c.l.bf16 %v39
    %v56 = vunpack.c.l.bf16 %v40
    %v57 = vunpack.c.l.bf16 %v41
    %v58 = vunpack.c.l.bf16 %v42
    %v59 = vunpack.c.l.bf16 %v43
    %v60 = vunpack.c.l.bf16 %v44
    %v61 = vunpack.c.l.bf16 %v45
    %v62 = vunpack.c.l.bf16 %v46
    %v63 = vunpack.c.l.bf16 %v47
    %v64 = vld [vmem:[#allocation6] sm:$0xff]
    %v65 = vld [vmem:[%s0] sm:$0xff]
    %66 = vmatprep.subr.mxu0 0.0
    %67 = vmatpush1.msra.mxu0 %v48
    %68 = vmatprep.subr.mxu0 0.0
    %69 = vmatpush1.msra.mxu0 %v49
    %70 = vmatprep.subr.mxu0 0.0
    %71 = vmatpush1.msra.mxu0 %v50
    %72 = vmatprep.subr.mxu0 0.0
    %73 = vmatpush1.msra.mxu0 %v51
    %74 = vmatprep.subr.mxu0 0.0
    %75 = vmatpush1.msra.mxu0 %v52
    %76 = vmatprep.subr.mxu0 0.0
    %77 = vmatpush1.msra.mxu0 %v53
    %78 = vmatprep.subr.mxu0 0.0
    %79 = vmatpush1.msra.mxu0 %v54
    %80 = vmatprep.subr.mxu0 0.0
    %81 = vmatpush1.msra.mxu0 %v55
    %82 = vmatprep.subr.mxu0 0.0
    %83 = vmatpush1.msra.mxu0 %v56
    %84 = vmatprep.subr.mxu0 0.0
    %85 = vmatpush1.msra.mxu0 %v57
    %86 = vmatprep.subr.mxu0 0.0
    %87 = vmatpush1.msra.mxu0 %v58
    %88 = vmatprep.subr.mxu0 0.0
    %89 = vmatpush1.msra.mxu0 %v59
    %90 = vmatprep.subr.mxu0 0.0
    %91 = vmatpush1.msra.mxu0 %v60
    %92 = vmatprep.subr.mxu0 0.0
    %93 = vmatpush1.msra.mxu0 %v61
    %94 = vmatprep.subr.mxu0 0.0
    %95 = vmatpush1.msra.mxu0 %v62
    %96 = vmatprep.subr.mxu0 0.0
    %97 = vmatpush1.msra.mxu0 %v63
    %98 = vmatprep.subr.mxu0 0.0
    %99 = vmatpush1.msra.mxu0 0.0
    %100 = vmatprep.subr.mxu0 0.0
    %101 = vmatpush1.msra.mxu0 0.0
    %102 = vmatprep.subr.mxu0 0.0
    %103 = vmatpush1.msra.mxu0 0.0
    %104 = vmatprep.subr.mxu0 0.0
    %105 = vmatpush1.msra.mxu0 0.0
    %106 = vmatprep.subr.mxu0 0.0
    %107 = vmatpush1.msra.mxu0 0.0
    %108 = vmatprep.subr.mxu0 0.0
    %109 = vmatpush1.msra.mxu0 0.0
    %110 = vmatprep.subr.mxu0 0.0
    %111 = vmatpush1.msra.mxu0 0.0
    %112 = vmatprep.subr.mxu0 0.0
    %113 = vmatpush1.msra.mxu0 0.0
    %114 = vmatprep.subr.mxu0 0.0
    %115 = vmatpush1.msra.mxu0 0.0
    %116 = vmatprep.subr.mxu0 0.0
    %117 = vmatpush1.msra.mxu0 0.0
    %118 = vmatprep.subr.mxu0 0.0
    %119 = vmatpush1.msra.mxu0 0.0
    %120 = vmatprep.subr.mxu0 0.0
    %121 = vmatpush1.msra.mxu0 0.0
    %122 = vmatprep.subr.mxu0 0.0
    %123 = vmatpush1.msra.mxu0 0.0
    %124 = vmatprep.subr.mxu0 0.0
    %125 = vmatpush1.msra.mxu0 0.0
    %126 = vmatprep.subr.mxu0 0.0
    %127 = vmatpush1.msra.mxu0 0.0
    %128 = vmatprep.subr.mxu0 0.0
    %129 = vmatpush1.msra.mxu0 0.0
    %130 = vmatprep.mubr.f32.mxu0 0.0
    %131 = vmatmul.mubr.f32.gmra.mrb[0].mxu0 %v65
    %v132 = vpop.f32.mrb[0].mxu0
    %v133 = vadd.f32 0.0, %v132
    %v134 = vpop.f32.mrb[0].mxu0
    %135 = vdwg.mxu0
    %v136 = vadd.f32 %v64, %v133
    %137 = vst [vmem:[#allocation6] sm:$0xff] %v136
    %v138 = vld [vmem:[#allocation2] sm:$0x1]
    %v139 = vadd.f32 %v48, %v49
    %v140 = vadd.f32 %v139, %v50
    %v141 = vadd.f32 %v140, %v51
    %v142 = vadd.f32 %v141, %v52
    %v143 = vadd.f32 %v142, %v53
    %v144 = vadd.f32 %v143, %v54
    %v145 = vadd.f32 %v144, %v55
    %v146 = vadd.f32 %v145, %v56
    %v147 = vadd.f32 %v146, %v57
    %v148 = vadd.f32 %v147, %v58
    %v149 = vadd.f32 %v148, %v59
    %v150 = vadd.f32 %v149, %v60
    %v151 = vadd.f32 %v150, %v61
    %v152 = vadd.f32 %v151, %v62
    %v153 = vadd.f32 %v152, %v63
    %v154 = vrot.slane %v153, 4
    %v155 = vadd.f32 %v153, %v154
    %v156 = vrot.slane %v155, 2
    %v157 = vadd.f32 %v155, %v156
    %v158 = vrot.slane %v157, 1
    %v159 = vadd.f32 %v157, %v158
    %v160 = vadd.f32 %v138, %v159
    %161 = vst [vmem:[#allocation2] sm:$0x1] %v160
    // Predicated region
    $region18: #{apply.1} parent=1 // pred_check
      %p162 = pneg %p26
    $region19: #{apply.1} parent=1 // pred_check_branch
      %164 = sbr.rel (%p162) target = $region21
    $region20: #{apply.1} parent=1 // pred_region
      %v165 = vld [vmem:[#allocation6] sm:$0xff]
      %v166 = vld [vmem:[#allocation2] sm:$0x1]
      %v167 = vsub.f32 1.0, %v166
      %v169 = vlaneseq
      %v170 = vshrl.u32 %v169, 7
      %v171 = vsub.s32 0, %v170
      %v172 = vrot.slane %v167, %v171
      %v174 = vadd.f32 %v165, %v172
      %v175 = vmax.f32 %v174, 0.0
      %176 = vst [vmem:[#allocation6] sm:$0xff] %v175
    $region21: #{apply.1} parent=1 // pred_fallthru
      _
    // Predicated region
    $region22: #{apply.1} parent=1 // pred_check
      _
    $region23: #{apply.1} parent=1 // pred_check_branch
      %178 = sbr.rel (0) target = $region25
    $region24: #{apply.1} parent=1 // pred_region
      %s180 = ssub.s32 128, 128
      %181 = vsyncadd [#allocation5], %s180
      %s183 = sshll.u32 [#allocation6], 4
      %s184 = int_to_ptr.vmem [resolvable:$true] %s183
      %186 = dma.vmem_to_hbm [thread:$0]  %s184, 128, %s2, [#allocation5]
    $region25: #{apply.1} parent=1 // pred_fallthru
      _
    // Predicated region
    $region26: #{apply.1} parent=1 // pred_check
      _
    $region27: #{apply.1} parent=1 // pred_check_branch
      %188 = sbr.rel (0) target = $region29
    $region28: #{apply.1} parent=1 // pred_region
      %189 = dma.done [#allocation5], 128
    $region29: #{apply.1} parent=1 // pred_fallthru
      _
    %190 = vsyncpa [#allocation4], 1
    %191 = vsyncpa [#allocation5], 1

</llo_original>
